<compile_context>
chip_gen: v7x
topology: tpu7x:2x2x1
jax: 0.10.0
libtpu: 0.0.40
codegen_flags: <defaults>
</compile_context>

<pallas_src>
import functools

import jax
import jax.numpy as jnp
from jax.experimental import pallas as pl
from jax.experimental.pallas import tpu as pltpu


_SMALL_PADDED_BYTES = 2 * 1024 * 1024   # single-block fast-path threshold (VMEM-padded)


def _cdiv(a, b):
    return -(-a // b)


def _round_up(a, b):
    return _cdiv(a, b) * b


def _chip_budget():
    """Return (per-block HBM byte target, vmem_limit_bytes) for this TPU generation."""
    vmem_cap = None
    get_info = getattr(pltpu, "get_tpu_info", None)
    if get_info is not None:
        try:
            info = get_info()
            for name in ("vmem_capacity_bytes", "vmem_bytes", "vmem_size_bytes"):
                v = getattr(info, name, None)
                if v:
                    vmem_cap = int(v)
                    break
        except Exception:
            vmem_cap = None
    if vmem_cap is not None and vmem_cap >= 96 * 1024 * 1024:
        # v5e / v6e: 128 MiB physical VMEM -> bigger blocks, 64 MiB scoped limit.
        return 16 * 1024 * 1024, 64 * 1024 * 1024
    # v7x (64 MiB physical VMEM) or unknown backend: stay conservative.
    return 8 * 1024 * 1024, 40 * 1024 * 1024


def _select_tiles(batch, n_chunks, itemsize, block_target):
    """Pick (tile_b, tile_c) for a (B, n_chunks, 128) view, ~block_target bytes/block."""
    pack = max(8, 32 // itemsize)                 # sublane packing: f32 8, bf16 16, i8 32
    row_bytes = n_chunks * 128 * itemsize
    if batch * row_bytes <= block_target:
        return batch, n_chunks                    # whole main part in one block
    if batch * pack * 128 * itemsize <= block_target:
        # All samples in every block; tile the chunk (sublane) axis.
        tile_c = (block_target // (batch * 128 * itemsize) // pack) * pack
        return batch, max(pack, tile_c)
    # Very large batch: tile over B in sublane-aligned groups (>= 8 rows so the
    # per-sample output block stays (8,128)-aligned); chunks as wide as fits.
    tile_b = 8
    tile_c = (block_target // (tile_b * 128 * itemsize) // pack) * pack
    if tile_c >= n_chunks:
        tile_c = n_chunks
        tile_b = (block_target // row_bytes // 8) * 8
        tile_b = min(max(tile_b, 8), batch)
    else:
        tile_c = max(pack, tile_c)
    return tile_b, tile_c


# ------------------------------ Pallas kernels -------------------------------

def _gp_small_kernel(g_ref, ss_ref):
    """Whole (B, D) gradient in one VMEM block -> per-sample sum of squares."""
    g = g_ref[...].astype(jnp.float32)
    ss_ref[...] = jnp.sum(g * g, axis=1, keepdims=True)


def _gp_main_kernel(g_ref, ss_ref, acc_ref, *,
                    n_chunks, tile_c, c_per_split, num_splits):
    """Streaming sum-of-squares over a (B, n_chunks, 128) gradient view.

    grid    : (num_splits, num_b_tiles, c_per_split) -> (parallel, parallel, arbitrary)
    g_ref   : (tile_b, tile_c, 128) VMEM tile, native dtype
    ss_ref  : (tile_b, 1) per-sample sum-of-squares for this (split, b_tile)
    acc_ref : (tile_b, 128) f32 lane-partial accumulator (VMEM scratch)
    """
    ki = pl.program_id(2)

    @pl.when(ki == 0)
    def _():
        acc_ref[...] = jnp.zeros_like(acc_ref)

    g = g_ref[...].astype(jnp.float32)            # (tile_b, tile_c, 128)

    if num_splits * c_per_split * tile_c == n_chunks:
        # Exact coverage: no tile is ever ragged or duplicated -> no masking.
        acc_ref[...] += jnp.sum(g * g, axis=1)
    else:
        # Global chunk-tile index *before* the index_map clamp.
        gt = pl.program_id(0) * c_per_split + ki
        start = gt * tile_c
        ragged = start + tile_c > n_chunks

        @pl.when(jnp.logical_not(ragged))
        def _():
            acc_ref[...] += jnp.sum(g * g, axis=1)

        @pl.when(ragged)
        def _():
            # Element-ragged last tile and clamped duplicate tiles: zero the
            # chunks past n_chunks.  Only these steps pay for the masking.
            idx = jax.lax.broadcasted_iota(jnp.int32, g.shape, 1)
            gm = jnp.where(start + idx < n_chunks, g, 0.0)
            acc_ref[...] += jnp.sum(gm * gm, axis=1)

    @pl.when(ki == pl.num_programs(2) - 1)
    def _():
        ss_ref[...] = jnp.sum(acc_ref[...], axis=1, keepdims=True)


# --------------------------------- Wrapper -----------------------------------

def _per_sample_sumsq(g):
    """Per-sample sum of squares of a (B, D) array; the reduction runs in Pallas."""
    B, D = g.shape
    if D == 0:
        return jnp.zeros((B,), jnp.float32)
    itemsize = g.dtype.itemsize
    block_target, vmem_limit = _chip_budget()

    # ---- Fast path: whole gradient as a single VMEM block (one DMA). -------
    padded_bytes = _round_up(B, 8) * _round_up(D, 128) * itemsize
    if padded_bytes <= _SMALL_PADDED_BYTES:
        ss = pl.pallas_call(
            _gp_small_kernel,
            out_shape=jax.ShapeDtypeStruct((B, 1), jnp.float32),
            grid_spec=pltpu.PrefetchScalarGridSpec(
                num_scalar_prefetch=0,
                grid=(1,),
                in_specs=[pl.BlockSpec((B, D), lambda i: (0, 0))],
                out_specs=pl.BlockSpec((B, 1), lambda i: (0, 0)),
            ),
            compiler_params=pltpu.CompilerParams(
                dimension_semantics=("arbitrary",),
                vmem_limit_bytes=vmem_limit,
            ),
        )(g)
        return ss[:, 0]

    # ---- Main path: (B, n_chunks, 128) sublane-packed streaming reduction. -
    n_chunks = D // 128
    d_main = n_chunks * 128

    # <128-wide tail (D % 128 != 0) handled in plain JAX so the hot loop keeps
    # dense (8,128) vregs.  Costs nothing when D % 128 == 0.
    tail_ss = 0.0
    if d_main < D:
        tail = g[:, d_main:].astype(jnp.float32)
        tail_ss = jnp.sum(tail * tail, axis=1)                       # (B,)
    if n_chunks == 0:
        # Degenerate D < 128 with a batch too large for the fast path.
        return jnp.zeros((B,), jnp.float32) + tail_ss

    # NOTE: for D % 128 != 0 the column slice materializes the main part once;
    # for the common D % 128 == 0 case this reshape is a free view.
    g_main = g if d_main == D else g[:, :d_main]
    g3 = g_main.reshape(B, n_chunks, 128)

    tile_b, tile_c = _select_tiles(B, n_chunks, itemsize, block_target)
    num_b_tiles = _cdiv(B, tile_b)
    num_c_tiles = _cdiv(n_chunks, tile_c)

    # Cross-TensorCore split of the chunk reduction (v7x megacore).  Costs one
    # extra tiny partial output on single-core chips, so it is not gated.
    num_splits = 2 if (num_b_tiles == 1 and num_c_tiles >= 2) else 1
    c_per_split = _cdiv(num_c_tiles, num_splits)
    b_pad = num_b_tiles * tile_b

    def g_index_map(s, bi, ki):
        gt = s * c_per_split + ki
        # Clamp so an over-covering split never issues a fully-OOB DMA; the
        # duplicated tile is zeroed by the in-kernel mask.
        return bi, jnp.minimum(gt, num_c_tiles - 1), 0

    kernel = functools.partial(
        _gp_main_kernel,
        n_chunks=n_chunks, tile_c=tile_c,
        c_per_split=c_per_split, num_splits=num_splits)

    partial_ss = pl.pallas_call(
        kernel,
        out_shape=jax.ShapeDtypeStruct((num_splits, b_pad, 1), jnp.float32),
        grid_spec=pltpu.PrefetchScalarGridSpec(
            num_scalar_prefetch=0,
            grid=(num_splits, num_b_tiles, c_per_split),
            in_specs=[pl.BlockSpec((tile_b, tile_c, 128), g_index_map)],
            out_specs=pl.BlockSpec((None, tile_b, 1),
                                   lambda s, bi, ki: (s, bi, 0)),
            scratch_shapes=[pltpu.VMEM((tile_b, 128), jnp.float32)],
        ),
        compiler_params=pltpu.CompilerParams(
            dimension_semantics=("parallel", "parallel", "arbitrary"),
            vmem_limit_bytes=vmem_limit,
        ),
    )(g3)

    ss = jnp.sum(partial_ss[:, :B, 0], axis=0)                       # (B,)
    return ss + tail_ss


def gradient_penalty_from_grads(grad_interp):
    """loss = mean_b((||grad_interp_b||_2 - 1)^2)."""
    B = grad_interp.shape[0]
    g = grad_interp.reshape(B, -1)          # native dtype (bf16 stays bf16 in HBM)
    ss = _per_sample_sumsq(g)
    norm = jnp.sqrt(ss)
    return jnp.mean((norm - 1.0) ** 2)


# ----------------------------- Module equivalent ------------------------------

class GradientPenaltyLoss:
    """JAX/Pallas equivalent of the PyTorch GradientPenaltyLoss module.

    # TODO(synk): torch.autograd.grad over a pre-built graph (interp_crit as a
    # tensor carrying grad history) has no Pallas/JAX equivalent; the critic
    # function is taken instead and the gradient is formed with jax.vjp using
    # a cotangent of ones (== grad_outputs filled with 1.0).
    """

    def __call__(self, interp, critic_fn):
        interp_crit, vjp_fn = jax.vjp(critic_fn, interp)
        grad_outputs = jnp.ones_like(interp_crit)       # get_grad_outputs(...)
        (grad_interp,) = vjp_fn(grad_outputs)
        return gradient_penalty_from_grads(grad_interp)


# -------------------------------- References ----------------------------------

def make_critic(key, in_features):
    """Deterministic synthetic critic: (B, C, H, W) -> (B, 1)."""
    w = jax.random.normal(key, (in_features, 1), dtype=jnp.float32) * 0.05

    def critic(x):
        B = x.shape[0]
        h = jnp.tanh(x.reshape(B, -1))
        return h @ w

    return critic


def reference_from_grads(grad_interp):
    g = grad_interp.reshape(grad_interp.shape[0], -1).astype(jnp.float32)
    norm = jnp.sqrt(jnp.sum(g * g, axis=1))
    return jnp.mean((norm - 1.0) ** 2)


def reference_loss(interp, critic_fn):
    """Pure-JAX reference of the full module forward."""
    interp_crit, vjp_fn = jax.vjp(critic_fn, interp)
    (grad_interp,) = vjp_fn(jnp.ones_like(interp_crit))
    return reference_from_grads(grad_interp)


# -------------------------------- Example run ---------------------------------

if __name__ == "__main__":
    key = jax.random.PRNGKey(0)
    k_x, k_w, k_g1, k_g2, k_g3 = jax.random.split(key, 5)

    # ---- Test 1: full module semantics, small NCHW input (fast path). ------
    B, C, H, W = 2, 4, 16, 16                     # NCHW, like PyTorch
    interp = jax.random.normal(k_x, (B, C, H, W), dtype=jnp.float32)
    critic_fn = make_critic(k_w, C * H * W)

    gp = GradientPenaltyLoss()
    loss = jax.block_until_ready(gp(interp, critic_fn))
    ref = jax.block_until_ready(reference_loss(interp, critic_fn))
    assert jnp.allclose(loss, ref, rtol=1e-5, atol=1e-5), (loss, ref)

    # ---- Test 2: large bf16 gradient, D % 128 == 0 -> tiled 3-D path with a
    #      chunk-axis split and an in-kernel-masked ragged last tile. --------
    B2, D2 = 4, 40000 * 128
    g2 = jax.random.normal(k_g1, (B2, D2), dtype=jnp.bfloat16)
    loss2 = jax.block_until_ready(gradient_penalty_from_grads(g2))
    ref2 = jax.block_until_ready(reference_from_grads(g2))
    assert jnp.allclose(loss2, ref2, rtol=1e-3, atol=1e-3), (loss2, ref2)

    # ---- Test 3: f32 gradient, D not a multiple of 128 -> 3-D kernel on the
    #      128-aligned columns + <128-wide tail handled in the wrapper. ------
    B3, D3 = 8, 65536 + 100
    g3 = jax.random.normal(k_g2, (B3, D3), dtype=jnp.float32)
    loss3 = jax.block_until_ready(gradient_penalty_from_grads(g3))
    ref3 = jax.block_until_ready(reference_from_grads(g3))
    assert jnp.allclose(loss3, ref3, rtol=1e-4, atol=1e-4), (loss3, ref3)

    # ---- Test 4: very large batch, small D -> B-tiled parallel grid. -------
    B4, D4 = 32768, 256
    g4 = jax.random.normal(k_g3, (B4, D4), dtype=jnp.float32)
    loss4 = jax.block_until_ready(gradient_penalty_from_grads(g4))
    ref4 = jax.block_until_ready(reference_from_grads(g4))
    assert jnp.allclose(loss4, ref4, rtol=1e-4, atol=1e-4), (loss4, ref4)

    print("KERNEL_OK")
</pallas_src>

<mosaic_0001>
module attributes {stable_mosaic.version = 11 : i64} {
  func.func @_gp_small_kernel(%arg0: i32, %arg1: memref<2x1024xf32, #tpu.memory_space<vmem>>, %arg2: memref<2x1xf32, #tpu.memory_space<vmem>>) attributes {dimension_semantics = [#tpu.dimension_semantics<arbitrary>], iteration_bounds = array<i64: 1>, scalar_prefetch = 0 : i64, scratch_operands = 0 : i64, tpu.core_type = #tpu.core_type<tc>, window_params = [{pipeline_mode = #tpu.pipeline_mode<synchronous>, transform_indices = @transform_0, window_bounds = array<i64: 2, 1024>}, {pipeline_mode = #tpu.pipeline_mode<synchronous>, transform_indices = @transform_1, window_bounds = array<i64: 2, 1>}]} {
    %c0 = arith.constant 0 : index
    %c0_0 = arith.constant 0 : index
    %0 = vector.load %arg1[%c0, %c0_0] : memref<2x1024xf32, #tpu.memory_space<vmem>>, vector<2x1024xf32>
    %1 = arith.mulf %0, %0 : vector<2x1024xf32>
    %cst = arith.constant dense<0.000000e+00> : vector<2xf32>
    %2 = vector.multi_reduction <add>, %1, %cst [1] : vector<2x1024xf32> to vector<2xf32>
    %3 = vector.shape_cast %2 : vector<2xf32> to vector<2x1xf32>
    %c0_1 = arith.constant 0 : index
    %c0_2 = arith.constant 0 : index
    %4 = vector.load %arg2[%c0_1, %c0_2] : memref<2x1xf32, #tpu.memory_space<vmem>>, vector<2x1xf32>
    tpu.vector_store %arg2[%c0_1, %c0_2], %3 {strides = array<i32>} : memref<2x1xf32, #tpu.memory_space<vmem>>, vector<2x1xf32>,
    return
  }
  func.func @transform_0(%arg0: i32) -> (i32, i32) {
    %c0_i32 = arith.constant 0 : i32
    %c0_i32_0 = arith.constant 0 : i32
    %c0_i32_1 = arith.constant 0 : i32
    return %c0_i32, %c0_i32_0 : i32, i32
  }
  func.func @transform_1(%arg0: i32) -> (i32, i32) {
    %c0_i32 = arith.constant 0 : i32
    %c0_i32_0 = arith.constant 0 : i32
    %c0_i32_1 = arith.constant 0 : i32
    return %c0_i32, %c0_i32_0 : i32, i32
  }
}

</mosaic_0001>

<llo_original>
// kernel: tpu_custom_call.1
$region0: #{tpu_custom_call.1}
  #allocation0 [shape = 'u32[]', space=smem, size = 0x4, offset = 0x4, fixed_abs, tag = 'smem constant byte address 0x4 - core index']
  #allocation1 [shape = 'u32[144,128]{1,0:T(1,128)}', space=vmem, size = 0x12000, scoped, tag = 'internal scratch']
  %s0 = inlined_call_operand.hbm [shape: f32[2,1024], index: 0, kind: input, shape index: {}]
  %s1 = inlined_call_operand.vmem [shape: f32[2,1], index: 1, kind: output, shape index: {}]
  %s2 = sld [smem:[#allocation0]]
  $region18: #{tpu_custom_call.1} parent=0
    _
  %s4 = ssub.s32 1, %s2
  %s5 = scalar_select 0, %s4, %s2
  $region1: #{tpu_custom_call.1} parent=0
    #allocation2 [shape = 'u8[8192]{0}', space=vmem, size = 0x2000, scoped, tag = 'input window, operand 0, single buffered']
    #allocation3 [shape = 's32[1]{0}', space=sflag, size = 0x4, scoped, tag = 'scoped memory for tpu_custom_call.1']
    %6 = vsyncpa [#allocation3], 0
    // Predicated region
    $region2: #{tpu_custom_call.1} parent=1 // pred_check
      _
    $region3: #{tpu_custom_call.1} parent=1 // pred_check_branch
      %8 = sbr.rel (0) target = $region5
    $region4: #{tpu_custom_call.1} parent=1 // pred_region
      %s10 = ssub.s32 256, 256
      %11 = vsyncadd [#allocation3], %s10
      %s13 = sshll.u32 [#allocation2], 4
      %s14 = int_to_ptr.vmem [resolvable:$true] %s13
      %16 = dma.hbm_to_vmem [thread:$0]  %s0, 256, %s14, [#allocation3]
    $region5: #{tpu_custom_call.1} parent=1 // pred_fallthru
      _
    // Predicated region
    $region6: #{tpu_custom_call.1} parent=1 // pred_check
      _
    $region7: #{tpu_custom_call.1} parent=1 // pred_check_branch
      %18 = sbr.rel (0) target = $region9
    $region8: #{tpu_custom_call.1} parent=1 // pred_region
      %19 = dma.done [#allocation3], 256
    $region9: #{tpu_custom_call.1} parent=1 // pred_fallthru
      _
    %v20 = vld [vmem:[#allocation2] sm:$0xff]
    %v21 = vld [vmem:[#allocation2 + $0x8] sm:$0xff]
    %v22 = vmul.f32 %v20, %v20
    %v23 = vmul.f32 %v21, %v21
    %v26 = vcombine.high %v22, %v22
    %v28 = vunpack.c.l.s4 1983009808
    %v29 = vunpack.c.0.s8 %v28
    %v30 = vlaneseq
    %v31 = vshrl.u32 %v30, 7
    %v32 = vsub.s32 %v29, %v31
    %v33 = vrot.slane %v22, %v32
    %v35 = vunpack.c.l.s4 1983009808
    %v36 = vunpack.c.0.s8 %v35
    %v37 = vlaneseq
    %v38 = vshrl.u32 %v37, 7
    %v39 = vsub.s32 %v36, %v38
    %v40 = vrot.slane %v26, %v39
    %v41 = vcombine.high %v33, %v33
    %v42 = vcombine.high %v40, %v40
    %v43 = vcombine.high %v23, %v23
    %v45 = vunpack.c.l.s4 1983009808
    %v46 = vunpack.c.0.s8 %v45
    %v47 = vlaneseq
    %v48 = vshrl.u32 %v47, 7
    %v49 = vsub.s32 %v46, %v48
    %v50 = vrot.slane %v23, %v49
    %v52 = vunpack.c.l.s4 1983009808
    %v53 = vunpack.c.0.s8 %v52
    %v54 = vlaneseq
    %v55 = vshrl.u32 %v54, 7
    %v56 = vsub.s32 %v53, %v55
    %v57 = vrot.slane %v43, %v56
    %v58 = vcombine.high %v50, %v50
    %v59 = vcombine.high %v57, %v57
    %vm68 = vcmask 1041408
    %v69 = vsel %vm68, %v33, 0.0
    %v70 = vsel %vm68, %v41, 0.0
    %v71 = vadd.f32 %v69, %v70
    %v72 = vsel %vm68, %v40, 0.0
    %v73 = vadd.f32 %v71, %v72
    %v74 = vsel %vm68, %v42, 0.0
    %v75 = vadd.f32 %v73, %v74
    %v76 = vsel %vm68, %v50, 0.0
    %v77 = vadd.f32 %v75, %v76
    %v78 = vsel %vm68, %v58, 0.0
    %v79 = vadd.f32 %v77, %v78
    %v80 = vsel %vm68, %v57, 0.0
    %v81 = vadd.f32 %v79, %v80
    %v82 = vsel %vm68, %v59, 0.0
    %v83 = vadd.f32 %v81, %v82
    %84 = vadd.xlane.f32.xlu0 %v83
    %v85 = vpop.xlane.xlu0 %84
    %vm86 = vcmask 1024
    %87 = vst.msk [vmem:[%s1] sm:$0x3] %vm86, %v85
    // Predicated region
    $region10: #{tpu_custom_call.1} parent=1 // pred_check
      _
    $region11: #{tpu_custom_call.1} parent=1 // pred_check_branch
      %89 = sbr.rel (0) target = $region13
    $region12: #{tpu_custom_call.1} parent=1 // pred_region
      _
    $region13: #{tpu_custom_call.1} parent=1 // pred_fallthru
      _
    // Predicated region
    $region14: #{tpu_custom_call.1} parent=1 // pred_check
      _
    $region15: #{tpu_custom_call.1} parent=1 // pred_check_branch
      %91 = sbr.rel (0) target = $region17
    $region16: #{tpu_custom_call.1} parent=1 // pred_region
      _
    $region17: #{tpu_custom_call.1} parent=1 // pred_fallthru
      _
    %92 = vsyncpa [#allocation3], 1

</llo_original>
